<compile_context>
chip_gen: v5e
topology: v5e:2x2
jax: 0.10.0
libtpu: 0.0.40
codegen_flags: <defaults>
</compile_context>

<pallas_src>
import functools

import jax
import jax.numpy as jnp
from jax.experimental import pallas as pl
from jax.experimental.pallas import tpu as pltpu

LN_EPS = 1e-5  # PyTorch nn.LayerNorm default


def _round_up(a, m):
    return (a + m - 1) // m * m


def _round_down(a, m):
    return a // m * m


def _cdiv(a, b):
    return -(-a // b)


def _device_vmem_and_cores():
    """Physical per-core VMEM bytes and whether the chip has 2 TensorCores."""
    phys = 64 << 20  # conservative fallback (v7x per-core VMEM)
    try:
        cap = getattr(pltpu.get_tpu_info(), "vmem_capacity_bytes", None)
        if cap:
            phys = int(cap)
    except Exception:
        pass
    two_cores = phys <= (64 << 20) + (1 << 20)  # v7x: 64 MiB/TC, 2 TCs/chip
    try:
        if "v7" in jax.devices()[0].device_kind.lower():
            two_cores = True
    except Exception:
        pass
    return phys, two_cores


def _proj_kernel(x_ref, w_ref, p_ref, o_ref, acc_ref, *, ep_rows):
    """Grid = (row_tiles, k_tiles); K is innermost (reduction).

    x_ref:   (tm, tk)  matmul dtype
    w_ref:   (tk, N)   matmul dtype
    p_ref:   (3, N)    f32  -- rows: [bias, gamma, beta]
    o_ref:   (tm, N)   output dtype (resident across the K axis)
    acc_ref: (tm, N)   f32 accumulator scratch
    """
    k = pl.program_id(1)

    @pl.when(k == 0)
    def _():
        acc_ref[...] = jnp.zeros_like(acc_ref)

    # Partial matmul on the MXU, f32 accumulation.
    acc_ref[...] += jnp.dot(x_ref[...], w_ref[...],
                            preferred_element_type=jnp.float32)

    @pl.when(k == pl.num_programs(1) - 1)
    def _():
        bias, gamma, beta = p_ref[0:1, :], p_ref[1:2, :], p_ref[2:3, :]
        tm = acc_ref.shape[0]
        # Row-slab epilogue: bounds f32 temporaries to (ep_rows, N) instead of
        # three full (tm, N) intermediates. Slices are static -> zero-cost views.
        for r0 in range(0, tm, ep_rows):
            h = jnp.maximum(acc_ref[r0:r0 + ep_rows, :] + bias, 0.0)
            mean = jnp.mean(h, axis=-1, keepdims=True)
            c = h - mean
            var = jnp.mean(c * c, axis=-1, keepdims=True)
            o_ref[r0:r0 + ep_rows, :] = (
                c * jax.lax.rsqrt(var + LN_EPS) * gamma + beta
            ).astype(o_ref.dtype)


def high_dimensional_projection(x, w, b, gamma, beta, *, tm=None, tk=None,
                                matmul_dtype=jnp.bfloat16):
    """x: (B, input_dim); w: (input_dim, output_dim); b/gamma/beta: (output_dim,).

    Pass w pre-cast to `matmul_dtype` to avoid an HBM copy of the weight matrix.
    """
    B, K = x.shape
    K2, N = w.shape
    assert K == K2
    assert b.shape == (N,) and gamma.shape == (N,) and beta.shape == (N,)

    mw = jnp.dtype(matmul_dtype).itemsize      # matmul-operand bytes
    ob = jnp.dtype(x.dtype).itemsize           # output bytes
    sub = max(8, 32 // mw)                     # sublane packing: f32->8, bf16->16, i8->32

    phys_vmem, two_cores = _device_vmem_and_cores()
    # Generation-aware budget: ~88 MiB on v5e/v6e (128 MiB VMEM), ~44 MiB on v7x (64 MiB).
    budget = min(int(phys_vmem * 0.70), 88 << 20)
    vmem_limit = int(min(phys_vmem - (8 << 20), budget + (16 << 20)))

    # ---- initial tile selection -------------------------------------------
    if tm is None:
        tm = min(1024, _round_up(B, sub))
    tm = max(sub, _round_up(tm, sub))

    if tk is None:
        if K <= 2048:
            tk = K                                   # single K pass, no weight padding
        else:
            # Prefer a divisor of K that's a multiple of 256 (v6e/v7x MXU width),
            # then 128; only pad K as a last resort.
            tk = next((c for c in (2048, 1024, 512, 256, 128) if K % c == 0), 512)
    if tk < K:
        tk = max(128, _round_up(tk, 128))

    # ---- VMEM footprint clamp: may shrink BOTH tm and tk -------------------
    def _footprint(tm_, tk_):
        return (2 * tm_ * tk_ * mw            # x tiles (double-buffered)
                + 2 * tk_ * N * mw            # weight tiles (double-buffered)
                + 2 * tm_ * N * ob            # output tiles (double-buffered)
                + tm_ * N * 4                 # f32 accumulator scratch
                + 2 * 8 * N * 4)              # packed params (sublane-padded)

    while _footprint(tm, tk) > budget:
        w_term = 2 * tk * N * mw
        row_term = tm * N * (4 + 2 * ob) + 2 * tm * tk * mw
        can_tk = tk > 128
        can_tm = tm > sub
        if not (can_tk or can_tm):
            break  # best effort; vmem_limit below still gives the compiler headroom
        if can_tk and (w_term >= row_term or not can_tm):
            tk = max(128, _round_down(tk // 2, 128))
        else:
            tm = max(sub, _round_down(tm // 2, sub))

    # v7x has 2 TensorCores: keep >= 2 tiles on the "parallel" row axis.
    if two_cores:
        while _cdiv(B, tm) < 2 and tm >= 2 * sub:
            tm = max(sub, _round_down(tm // 2, sub))

    # ---- padding (skipped when the tiles divide evenly) --------------------
    if tk >= K:
        tk, Kp = K, K
    else:
        Kp = _round_up(K, tk)
    Bp = _round_up(B, tm)

    xp = x if (Bp == B and Kp == K) else jnp.pad(x, ((0, Bp - B), (0, Kp - K)))
    wp = w if Kp == K else jnp.pad(w, ((0, Kp - K), (0, 0)))
    if xp.dtype != matmul_dtype:
        xp = xp.astype(matmul_dtype)
    if wp.dtype != matmul_dtype:
        wp = wp.astype(matmul_dtype)

    # Pack bias / gamma / beta into one (3, N) f32 block: single DMA + buffer.
    params = jnp.stack([b, gamma, beta], axis=0).astype(jnp.float32)

    grid = (Bp // tm, Kp // tk)

    # Epilogue row-slab size: largest of these that divides tm.
    ep_rows = tm
    for r in (128, 64, 32, 16, 8):
        if r <= tm and tm % r == 0:
            ep_rows = r
            break

    cost = pl.CostEstimate(
        flops=2 * Bp * Kp * N + 8 * Bp * N,
        transcendentals=Bp,
        bytes_accessed=(Bp * Kp * mw               # x read once
                        + grid[0] * Kp * N * mw    # W re-streamed once per row tile
                        + Bp * N * ob              # output
                        + 3 * N * 4),              # packed params
    )

    out = pl.pallas_call(
        functools.partial(_proj_kernel, ep_rows=ep_rows),
        out_shape=jax.ShapeDtypeStruct((Bp, N), x.dtype),
        grid_spec=pltpu.PrefetchScalarGridSpec(
            num_scalar_prefetch=0,
            grid=grid,
            in_specs=[
                pl.BlockSpec((tm, tk), lambda i, k: (i, k)),   # x row/K tile
                pl.BlockSpec((tk, N), lambda i, k: (k, 0)),    # weight K tile
                pl.BlockSpec((3, N), lambda i, k: (0, 0)),     # bias/gamma/beta
            ],
            # Output ignores k -> stays resident (accumulated) across the K axis.
            out_specs=pl.BlockSpec((tm, N), lambda i, k: (i, 0)),
            scratch_shapes=[pltpu.VMEM((tm, N), jnp.float32)],
        ),
        compiler_params=pltpu.CompilerParams(
            dimension_semantics=("parallel", "arbitrary"),
            vmem_limit_bytes=vmem_limit,
        ),
        cost_estimate=cost,
    )(xp, wp, params)

    return out[:B]


def reference(x, w, b, gamma, beta):
    h = jnp.dot(x, w, precision=jax.lax.Precision.HIGHEST) + b
    h = jnp.maximum(h, 0.0)
    mean = jnp.mean(h, axis=-1, keepdims=True)
    var = jnp.mean((h - mean) ** 2, axis=-1, keepdims=True)
    return (h - mean) * jax.lax.rsqrt(var + LN_EPS) * gamma + beta


if __name__ == "__main__":
    key = jax.random.PRNGKey(0)
    B, input_dim, output_dim = 16, 32, 128

    kx, kw, kb = jax.random.split(key, 3)
    x = jax.random.normal(kx, (B, input_dim), dtype=jnp.float32)
    # Deterministic synthetic parameters (nn.Linear-like scale), LayerNorm init.
    bound = 1.0 / (input_dim ** 0.5)
    w = jax.random.uniform(kw, (input_dim, output_dim), jnp.float32, -bound, bound)
    b = jax.random.uniform(kb, (output_dim,), jnp.float32, -bound, bound)
    gamma = jnp.ones((output_dim,), jnp.float32)
    beta = jnp.zeros((output_dim,), jnp.float32)

    ref = reference(x, w, b, gamma, beta)

    # Exact f32 matmul path (bit-faithful to the PyTorch forward semantics).
    out_f32 = jax.block_until_ready(
        high_dimensional_projection(x, w, b, gamma, beta,
                                    matmul_dtype=jnp.float32))
    assert out_f32.shape == (B, output_dim)
    assert jnp.allclose(out_f32, ref, atol=2e-5, rtol=2e-5), "f32 path mismatch"

    # Default bf16 MXU path (f32 accumulation + f32 epilogue).
    out_bf16 = jax.block_until_ready(
        high_dimensional_projection(x, w, b, gamma, beta))
    assert jnp.allclose(out_bf16, ref, atol=3e-2, rtol=3e-2), "bf16 path mismatch"

    # Batch not divisible by the row tile exercises the padding path.
    out_odd = jax.block_until_ready(
        high_dimensional_projection(x[:13], w, b, gamma, beta,
                                    matmul_dtype=jnp.float32))
    assert out_odd.shape == (13, output_dim)
    assert jnp.allclose(out_odd, ref[:13], atol=2e-5, rtol=2e-5), "padded-batch mismatch"

    # K-tiled path (grid k > 1) exercises the resident accumulator across K.
    K2, N2 = 384, output_dim
    xk = jax.random.normal(jax.random.PRNGKey(1), (B, K2), dtype=jnp.float32)
    wk = jax.random.uniform(jax.random.PRNGKey(2), (K2, N2), jnp.float32, -0.05, 0.05)
    refk = reference(xk, wk, b, gamma, beta)
    outk = jax.block_until_ready(
        high_dimensional_projection(xk, wk, b, gamma, beta, tk=128,
                                    matmul_dtype=jnp.float32))
    assert jnp.allclose(outk, refk, atol=1e-4, rtol=1e-4), "K-tiled path mismatch"

    print("KERNEL_OK")
</pallas_src>

<mosaic_0001>
module attributes {stable_mosaic.version = 11 : i64} {
  func.func @_proj_kernel(%arg0: i32, %arg1: i32, %arg2: memref<8x32xf32, #tpu.memory_space<vmem>>, %arg3: memref<32x128xf32, #tpu.memory_space<vmem>>, %arg4: memref<3x128xf32, #tpu.memory_space<vmem>>, %arg5: memref<8x128xf32, #tpu.memory_space<vmem>>, %arg6: memref<8x128xf32, #tpu.memory_space<vmem>>) attributes {dimension_semantics = [#tpu.dimension_semantics<parallel>, #tpu.dimension_semantics<arbitrary>], iteration_bounds = array<i64: 2, 1>, scalar_prefetch = 0 : i64, scratch_operands = 1 : i64, tpu.core_type = #tpu.core_type<tc>, window_params = [{transform_indices = @transform_0, window_bounds = array<i64: 8, 32>}, {transform_indices = @transform_1, window_bounds = array<i64: 32, 128>}, {pipeline_mode = #tpu.pipeline_mode<synchronous>, transform_indices = @transform_2, window_bounds = array<i64: 3, 128>}, {transform_indices = @transform_3, window_bounds = array<i64: 8, 128>}]} {
    %c0_i32 = arith.constant 0 : i32
    %0 = arith.cmpi eq, %arg1, %c0_i32 : i32
    %1 = arith.extui %0 : i1 to i32
    %c0_i32_0 = arith.constant 0 : i32
    %2 = arith.cmpi ne, %1, %c0_i32_0 : i32
    scf.if %2 {
      %cst_10 = arith.constant 0.000000e+00 : f32
      %12 = vector.broadcast %cst_10 : f32 to vector<8x128xf32>
      %c0_11 = arith.constant 0 : index
      %c0_12 = arith.constant 0 : index
      %13 = vector.load %arg6[%c0_11, %c0_12] : memref<8x128xf32, #tpu.memory_space<vmem>>, vector<8x128xf32>
      tpu.vector_store %arg6[%c0_11, %c0_12], %12 {strides = array<i32>} : memref<8x128xf32, #tpu.memory_space<vmem>>, vector<8x128xf32>,
    } else {
    }
    %c0 = arith.constant 0 : index
    %c0_1 = arith.constant 0 : index
    %3 = vector.load %arg6[%c0, %c0_1] : memref<8x128xf32, #tpu.memory_space<vmem>>, vector<8x128xf32>
    %c0_2 = arith.constant 0 : index
    %c0_3 = arith.constant 0 : index
    %4 = vector.load %arg2[%c0_2, %c0_3] : memref<8x32xf32, #tpu.memory_space<vmem>>, vector<8x32xf32>
    %c0_4 = arith.constant 0 : index
    %c0_5 = arith.constant 0 : index
    %5 = vector.load %arg3[%c0_4, %c0_5] : memref<32x128xf32, #tpu.memory_space<vmem>>, vector<32x128xf32>
    %cst = arith.constant dense<0.000000e+00> : vector<8x128xf32>
    %6 = tpu.matmul %4, %5, %cst {dimension_numbers = #tpu.dot_dimension_numbers<[1], [0], [0], [1], [0, 0, 1, 1], [], []>} : vector<8x32xf32>, vector<32x128xf32>, vector<8x128xf32> -> vector<8x128xf32>
    %7 = arith.addf %3, %6 : vector<8x128xf32>
    %c0_6 = arith.constant 0 : index
    %c0_7 = arith.constant 0 : index
    %8 = vector.load %arg6[%c0_6, %c0_7] : memref<8x128xf32, #tpu.memory_space<vmem>>, vector<8x128xf32>
    tpu.vector_store %arg6[%c0_6, %c0_7], %7 {strides = array<i32>} : memref<8x128xf32, #tpu.memory_space<vmem>>, vector<8x128xf32>,
    %c0_i32_8 = arith.constant 0 : i32
    %9 = arith.cmpi eq, %arg1, %c0_i32_8 : i32
    %10 = arith.extui %9 : i1 to i32
    %c0_i32_9 = arith.constant 0 : i32
    %11 = arith.cmpi ne, %10, %c0_i32_9 : i32
    scf.if %11 {
      %c0_10 = arith.constant 0 : index
      %c0_11 = arith.constant 0 : index
      %12 = vector.load %arg4[%c0_10, %c0_11] : memref<3x128xf32, #tpu.memory_space<vmem>>, vector<1x128xf32>
      %c1 = arith.constant 1 : index
      %c0_12 = arith.constant 0 : index
      %13 = vector.load %arg4[%c1, %c0_12] : memref<3x128xf32, #tpu.memory_space<vmem>>, vector<1x128xf32>
      %c2 = arith.constant 2 : index
      %c0_13 = arith.constant 0 : index
      %14 = vector.load %arg4[%c2, %c0_13] : memref<3x128xf32, #tpu.memory_space<vmem>>, vector<1x128xf32>
      %c0_14 = arith.constant 0 : index
      %c0_15 = arith.constant 0 : index
      %15 = vector.load %arg6[%c0_14, %c0_15] : memref<8x128xf32, #tpu.memory_space<vmem>>, vector<8x128xf32>
      %16 = vector.broadcast %12 : vector<1x128xf32> to vector<8x128xf32>
      %17 = arith.addf %15, %16 : vector<8x128xf32>
      %cst_16 = arith.constant 0.000000e+00 : f32
      %18 = vector.broadcast %cst_16 : f32 to vector<8x128xf32>
      %19 = arith.maximumf %17, %18 : vector<8x128xf32>
      %cst_17 = arith.constant dense<0.000000e+00> : vector<8xf32>
      %20 = vector.multi_reduction <add>, %19, %cst_17 [1] : vector<8x128xf32> to vector<8xf32>
      %21 = vector.shape_cast %20 : vector<8xf32> to vector<8x1xf32>
      %cst_18 = arith.constant 1.280000e+02 : f32
      %22 = vector.broadcast %cst_18 : f32 to vector<8x1xf32>
      %23 = arith.divf %21, %22 : vector<8x1xf32>
      %24 = vector.broadcast %23 : vector<8x1xf32> to vector<8x128xf32>
      %25 = arith.subf %19, %24 : vector<8x128xf32>
      %26 = arith.mulf %25, %25 : vector<8x128xf32>
      %cst_19 = arith.constant dense<0.000000e+00> : vector<8xf32>
      %27 = vector.multi_reduction <add>, %26, %cst_19 [1] : vector<8x128xf32> to vector<8xf32>
      %28 = vector.shape_cast %27 : vector<8xf32> to vector<8x1xf32>
      %cst_20 = arith.constant 1.280000e+02 : f32
      %29 = vector.broadcast %cst_20 : f32 to vector<8x1xf32>
      %30 = arith.divf %28, %29 : vector<8x1xf32>
      %cst_21 = arith.constant 9.99999974E-6 : f32
      %31 = vector.broadcast %cst_21 : f32 to vector<8x1xf32>
      %32 = arith.addf %30, %31 : vector<8x1xf32>
      %33 = math.rsqrt %32 : vector<8x1xf32>
      %34 = vector.broadcast %33 : vector<8x1xf32> to vector<8x128xf32>
      %35 = arith.mulf %25, %34 : vector<8x128xf32>
      %36 = vector.broadcast %13 : vector<1x128xf32> to vector<8x128xf32>
      %37 = arith.mulf %35, %36 : vector<8x128xf32>
      %38 = vector.broadcast %14 : vector<1x128xf32> to vector<8x128xf32>
      %39 = arith.addf %37, %38 : vector<8x128xf32>
      %c0_22 = arith.constant 0 : index
      %c0_23 = arith.constant 0 : index
      %40 = vector.load %arg5[%c0_22, %c0_23] : memref<8x128xf32, #tpu.memory_space<vmem>>, vector<8x128xf32>
      tpu.vector_store %arg5[%c0_22, %c0_23], %39 {strides = array<i32>} : memref<8x128xf32, #tpu.memory_space<vmem>>, vector<8x128xf32>,
    } else {
    }
    return
  }
  func.func @transform_0(%arg0: i32, %arg1: i32) -> (i32, i32) {
    %c0_i32 = arith.constant 0 : i32
    return %arg0, %arg1 : i32, i32
  }
  func.func @transform_1(%arg0: i32, %arg1: i32) -> (i32, i32) {
    %c0_i32 = arith.constant 0 : i32
    %c0_i32_0 = arith.constant 0 : i32
    return %arg1, %c0_i32 : i32, i32
  }
  func.func @transform_2(%arg0: i32, %arg1: i32) -> (i32, i32) {
    %c0_i32 = arith.constant 0 : i32
    %c0_i32_0 = arith.constant 0 : i32
    %c0_i32_1 = arith.constant 0 : i32
    return %c0_i32, %c0_i32_0 : i32, i32
  }
  func.func @transform_3(%arg0: i32, %arg1: i32) -> (i32, i32) {
    %c0_i32 = arith.constant 0 : i32
    %c0_i32_0 = arith.constant 0 : i32
    return %arg0, %c0_i32 : i32, i32
  }
}

</mosaic_0001>

<llo_original>
// kernel: tpu_custom_call.1
$region0: #{tpu_custom_call.1}
  #allocation0 [shape = 'u32[]', space=smem, size = 0x4, offset = 0x4, fixed_abs, tag = 'smem constant byte address 0x4 - core index']
  #allocation1 [shape = 'u32[72,128]{1,0:T(1,128)}', space=vmem, size = 0x9000, scoped, tag = 'internal scratch']
  #allocation2 [shape = 'f32[8,128]{1,0:T(8,128)}', space=vmem, size = 0x1000, scoped, tag = 'scratch operand']
  %s0 = inlined_call_operand.hbm [shape: f32[16,32], index: 0, kind: input, shape index: {}]
  %s1 = inlined_call_operand.hbm [shape: f32[32,128], index: 1, kind: input, shape index: {}]
  %s2 = inlined_call_operand.hbm [shape: f32[3,128], index: 2, kind: input, shape index: {}]
  %s3 = inlined_call_operand.hbm [shape: f32[16,128], index: 3, kind: output, shape index: {}]
  %s4 = sld [smem:[#allocation0]]
  $region65: #{tpu_custom_call.1} parent=0
    _
  %s6 = ssub.s32 1, %s4
  %s7 = scalar_select 0, %s6, %s4
  $region1: #{tpu_custom_call.1} parent=0
    #allocation3 [shape = 'u8[8192]{0}', space=vmem, size = 0x2000, scoped, tag = 'input window, operand 0']
    #allocation4 [shape = 's32[2]{0}', space=sflag, size = 0x8, scoped, tag = 'scoped memory for tpu_custom_call.1']
    #allocation5 [shape = 's32[2]{0}', space=sflag, size = 0x8, scoped, tag = 'scoped memory for tpu_custom_call.1']
    #allocation6 [shape = 'u8[16384]{0}', space=vmem, size = 0x4000, scoped, tag = 'input window, operand 1, single buffered']
    #allocation7 [shape = 's32[1]{0}', space=sflag, size = 0x4, scoped, tag = 'scoped memory for tpu_custom_call.1']
    #allocation8 [shape = 'u8[2048]{0}', space=vmem, size = 0x800, scoped, tag = 'input window, operand 2, single buffered']
    #allocation9 [shape = 'u8[8192]{0}', space=vmem, size = 0x2000, scoped, tag = 'output window, operand 0']
    %8 = vsyncpa [#allocation4], 0
    %s9 = scalar_lea.sflag [#allocation4], 1
    %10 = vsyncpa %s9, 0
    %11 = vsyncpa [#allocation7], 0
    %12 = vsyncpa [#allocation5], 0
    %s13 = scalar_lea.sflag [#allocation5], 1
    %14 = vsyncpa %s13, 0
    loop: start=0, step=1, limit=4
    $region2: #{tpu_custom_call.1} parent=1 // loop_pre_header
      _
    $region3: #{tpu_custom_call.1} parent=1 // loop_header
      %s16 = sphi 0, %s20
      %p17 = scmp.ge.s32.totalorder %s16, 4
      %s23 = sphi 0, %s35
      %s24 = sphi 0, %s31
      %s25 = sphi 0, %s23
      %s26 = sphi 0, %s24
      %s27 = sphi 0, %s25
      %s28 = sphi 0, %s26
      %s40 = sphi 0, %s42
      %s43 = sphi 0, %s40
      %s44 = sphi 0, %s43
      %s60 = sphi 0, %s44
      %s66 = sphi 0, %s68
      %s69 = sphi 0, %s66
      %s70 = sphi 0, %s69
      %s86 = sphi 0, %s70
      %s90 = sphi 0, %s90
      %s92 = sphi 0, %s90
      %s93 = sphi 0, %s92
      %s107 = sphi 0, %s93
      %s113 = sphi 0, %s115
      %s116 = sphi 0, %s113
      %s117 = sphi 0, %s116
      %s133 = sphi 0, %s117
    $region4: #{tpu_custom_call.1} parent=1 // loop_header_branch
      %19 = sbr.rel (%p17) target = $region8
    $region5: #{tpu_custom_call.1} parent=1 // loop_body
      %s21 = ssub.s32 %s16, 1
      %s22 = ssub.s32 %s16, 2
      %s29 = sadd.s32 1, %s24
      %p30 = scmp.ge.s32.totalorder %s29, 1
      %s31 = scalar_select %p30, 0, %s29
      %s32 = sadd.s32 1, %s23
      %s33 = scalar_select %p30, %s32, %s23
      %p34 = scmp.ge.s32.totalorder %s33, 2
      %s35 = scalar_select %p34, 0, %s33
      %s36 = ssub.s32 %s23, %s35
      %s37 = ssub.s32 %s24, %s31
      %s38 = sor.u32 %s36, %s37
      %p39 = scmp.eq.s32.totalorder %s38, 0
      %s41 = sadd.s32 %s40, 1
      %s42 = scalar_select %p39, %s40, %s41
      %p45 = pneg %p39
      %p46 = scmp.eq.s32.totalorder %s16, 1
      %p47 = por %p45, %p46
      %p48 = scmp.ne.s32.totalorder %s40, %s43
      %p49 = scmp.eq.s32.totalorder %s16, 0
      %p50 = por %p48, %p49
      %p51 = scmp.ne.s32.totalorder %s40, %s43
      %p52 = scmp.eq.s32.totalorder %s21, 1
      %p53 = por %p51, %p52
      %p54 = scmp.ne.s32.totalorder %s43, %s44
      %p55 = scmp.eq.s32.totalorder %s21, 0
      %p56 = por %p54, %p55
      %p57 = scmp.ne.s32.totalorder %s43, %s44
      %p58 = scmp.eq.s32.totalorder %s22, 1
      %p59 = por %p57, %p58
      %p61 = scmp.ne.s32.totalorder %s44, %s60
      %p62 = scmp.eq.s32.totalorder %s22, 0
      %p63 = por %p61, %p62
      %s64 = ssub.s32 %s24, %s31
      %p65 = scmp.eq.s32.totalorder %s64, 0
      %s67 = sadd.s32 %s66, 1
      %s68 = scalar_select %p65, %s66, %s67
      %p71 = pneg %p65
      %p72 = scmp.eq.s32.totalorder %s16, 1
      %p73 = por %p71, %p72
      %p74 = scmp.ne.s32.totalorder %s66, %s69
      %p75 = scmp.eq.s32.totalorder %s16, 0
      %p76 = por %p74, %p75
      %p77 = scmp.ne.s32.totalorder %s66, %s69
      %p78 = scmp.eq.s32.totalorder %s21, 1
      %p79 = por %p77, %p78
      %p80 = scmp.ne.s32.totalorder %s69, %s70
      %p81 = scmp.eq.s32.totalorder %s21, 0
      %p82 = por %p80, %p81
      %p83 = scmp.ne.s32.totalorder %s69, %s70
      %p84 = scmp.eq.s32.totalorder %s22, 1
      %p85 = por %p83, %p84
      %p87 = scmp.ne.s32.totalorder %s70, %s86
      %p88 = scmp.eq.s32.totalorder %s22, 0
      %p89 = por %p87, %p88
      %s91 = sadd.s32 %s90, 1
      %p94 = scmp.eq.s32.totalorder %s16, 1
      %p95 = scmp.ne.s32.totalorder %s90, %s92
      %p96 = scmp.eq.s32.totalorder %s16, 0
      %p97 = por %p95, %p96
      %p98 = scmp.ne.s32.totalorder %s90, %s92
      %p99 = scmp.eq.s32.totalorder %s21, 1
      %p100 = por %p98, %p99
      %p101 = scmp.ne.s32.totalorder %s92, %s93
      %p102 = scmp.eq.s32.totalorder %s21, 0
      %p103 = por %p101, %p102
      %p104 = scmp.ne.s32.totalorder %s92, %s93
      %p105 = scmp.eq.s32.totalorder %s22, 1
      %p106 = por %p104, %p105
      %p108 = scmp.ne.s32.totalorder %s93, %s107
      %p109 = scmp.eq.s32.totalorder %s22, 0
      %p110 = por %p108, %p109
      %s111 = ssub.s32 %s23, %s35
      %p112 = scmp.eq.s32.totalorder %s111, 0
      %s114 = sadd.s32 %s113, 1
      %s115 = scalar_select %p112, %s113, %s114
      %p118 = pneg %p112
      %p119 = scmp.eq.s32.totalorder %s16, 1
      %p120 = por %p118, %p119
      %p121 = scmp.ne.s32.totalorder %s113, %s116
      %p122 = scmp.eq.s32.totalorder %s16, 0
      %p123 = por %p121, %p122
      %p124 = scmp.ne.s32.totalorder %s113, %s116
      %p125 = scmp.eq.s32.totalorder %s21, 1
      %p126 = por %p124, %p125
      %p127 = scmp.ne.s32.totalorder %s116, %s117
      %p128 = scmp.eq.s32.totalorder %s21, 0
      %p129 = por %p127, %p128
      %p130 = scmp.ne.s32.totalorder %s116, %s117
      %p131 = scmp.eq.s32.totalorder %s22, 1
      %p132 = por %p130, %p131
      %p134 = scmp.ne.s32.totalorder %s117, %s133
      %p135 = scmp.eq.s32.totalorder %s22, 0
      %p136 = por %p134, %p135
      %p137 = scmp.le.s32.totalorder 1, %s16
      %p138 = scmp.lt.s32.totalorder %s16, 3
      %p139 = pnand %p137, %p138
      %p140 = pneg %p139
      // Predicated region
      $region9: #{tpu_custom_call.1} parent=5 // pred_check
        _
      $region10: #{tpu_custom_call.1} parent=5 // pred_check_branch
        %142 = sbr.rel (%p139) target = $region12
      $region11: #{tpu_custom_call.1} parent=5 // pred_region
        %s143 = ssub.s32 %s16, 1
        // Predicated region
        $region13: #{tpu_custom_call.1} parent=11 // pred_check
          %p144 = pneg %p82
        $region14: #{tpu_custom_call.1} parent=11 // pred_check_branch
          %146 = sbr.rel (%p144) target = $region16
        $region15: #{tpu_custom_call.1} parent=11 // pred_region
          %s147 = smul.u32 4, %s26
          %149 = vsyncadd [#allocation7], 0
          %s150 = smul.addr %s147, 8
          %s151 = scalar_lea.hbm %s1, %s150
          %s152 = sshll.u32 %s151, 4
          %s153 = int_to_ptr.hbm [resolvable:$true] %s152
          %s154 = sshll.u32 [#allocation6], 4
          %s155 = int_to_ptr.vmem [resolvable:$true] %s154
          %160 = dma.hbm_to_vmem [thread:$0]  %s153, 512, %s155, [#allocation7], 128, 128, 8
        $region16: #{tpu_custom_call.1} parent=11 // pred_fallthru
          _
        // Predicated region
        $region17: #{tpu_custom_call.1} parent=11 // pred_check
          %p161 = pneg %p103
        $region18: #{tpu_custom_call.1} parent=11 // pred_check_branch
          %163 = sbr.rel (%p161) target = $region20
        $region19: #{tpu_custom_call.1} parent=11 // pred_region
          %165 = vsyncadd [#allocation7], 0
          %s167 = sshll.u32 %s2, 4
          %s168 = int_to_ptr.hbm [resolvable:$true] %s167
          %s169 = sshll.u32 [#allocation8], 4
          %s170 = int_to_ptr.vmem [resolvable:$true] %s169
          %172 = dma.hbm_to_vmem [thread:$0]  %s168, 64, %s170, [#allocation7]
        $region20: #{tpu_custom_call.1} parent=11 // pred_fallthru
          _
      $region12: #{tpu_custom_call.1} parent=5 // pred_fallthru
        _
      %p173 = scmp.lt.s32.totalorder %s16, 2
      // Predicated region
      $region21: #{tpu_custom_call.1} parent=5 // pred_check
        %p174 = pneg %p173
      $region22: #{tpu_custom_call.1} parent=5 // pred_check_branch
        %176 = sbr.rel (%p174) target = $region24
      $region23: #{tpu_custom_call.1} parent=5 // pred_region
        // Predicated region
        $region25: #{tpu_custom_call.1} parent=23 // pred_check
          %p177 = pneg %p50
        $region26: #{tpu_custom_call.1} parent=23 // pred_check_branch
          %179 = sbr.rel (%p177) target = $region28
        $region27: #{tpu_custom_call.1} parent=23 // pred_region
          %s180 = sand.u32 %s40, 1
          %s181 = scalar_lea.sflag [#allocation4], %s180
          %s182 = sand.u32 %s40, 1
          %s183 = smul.addr %s182, 8
          %s184 = scalar_lea.vmem [#allocation3], %s183
          %186 = vsyncadd %s181, 0
          %s187 = sadd.s32 %s24, %s23
          %s188 = smul.addr %s187, 8
          %s189 = scalar_lea.hbm %s0, %s188
          %s191 = sshll.u32 %s189, 4
          %s192 = int_to_ptr.hbm [resolvable:$true] %s191
          %s193 = sshll.u32 %s184, 4
          %s194 = int_to_ptr.vmem [resolvable:$true] %s193
          %196 = dma.hbm_to_vmem [thread:$0]  %s192, 128, %s194, %s181
        $region28: #{tpu_custom_call.1} parent=23 // pred_fallthru
          _
      $region24: #{tpu_custom_call.1} parent=5 // pred_fallthru
        _
      %p197 = scmp.le.s32.totalorder 1, %s16
      %p198 = scmp.lt.s32.totalorder %s16, 3
      %p199 = pnand %p197, %p198
      %p200 = pneg %p199
      // Predicated region
      $region29: #{tpu_custom_call.1} parent=5 // pred_check
        _
      $region30: #{tpu_custom_call.1} parent=5 // pred_check_branch
        %202 = sbr.rel (%p199) target = $region32
      $region31: #{tpu_custom_call.1} parent=5 // pred_region
        %s203 = ssub.s32 %s16, 1
        %s204 = sand.u32 %s43, 1
        %s205 = scalar_lea.sflag [#allocation4], %s204
        %s206 = sand.u32 %s43, 1
        %s207 = smul.addr %s206, 8
        %s208 = scalar_lea.vmem [#allocation3], %s207
        // Predicated region
        $region33: #{tpu_custom_call.1} parent=31 // pred_check
          %p209 = pneg %p56
        $region34: #{tpu_custom_call.1} parent=31 // pred_check_branch
          %211 = sbr.rel (%p209) target = $region36
        $region35: #{tpu_custom_call.1} parent=31 // pred_region
          %213 = dma.done %s205, 128
        $region36: #{tpu_custom_call.1} parent=31 // pred_fallthru
          _
        // Predicated region
        $region37: #{tpu_custom_call.1} parent=31 // pred_check
          %p214 = pneg %p82
        $region38: #{tpu_custom_call.1} parent=31 // pred_check_branch
          %216 = sbr.rel (%p214) target = $region40
        $region39: #{tpu_custom_call.1} parent=31 // pred_region
          %218 = dma.done [#allocation7], 512
        $region40: #{tpu_custom_call.1} parent=31 // pred_fallthru
          _
        // Predicated region
        $region41: #{tpu_custom_call.1} parent=31 // pred_check
          %p219 = pneg %p103
        $region42: #{tpu_custom_call.1} parent=31 // pred_check_branch
          %221 = sbr.rel (%p219) target = $region44
        $region43: #{tpu_custom_call.1} parent=31 // pred_region
          %223 = dma.done [#allocation7], 64
        $region44: #{tpu_custom_call.1} parent=31 // pred_fallthru
          _
        %s224 = sand.u32 %s43, 1
        %s225 = scalar_lea.sflag [#allocation4], %s224
        %s226 = sand.u32 %s43, 1
        %s227 = smul.addr %s226, 8
        %s228 = scalar_lea.vmem [#allocation3], %s227
        %p229 = pneg %p56
        %p230 = pneg %p53
        %p231 = pneg %p82
        %p232 = pneg %p79
        %p233 = pneg %p103
        %p234 = pneg %p100
        %p235 = pneg %p129
        %p236 = pneg %p126
        %s237 = sand.u32 %s116, 1
        %s238 = scalar_lea.sflag [#allocation5], %s237
        %s239 = sand.u32 %s116, 1
        %s240 = smul.addr %s239, 8
        %s241 = scalar_lea.vmem [#allocation9], %s240
        %s242 = smul.u32 4, %s26
        %p243 = scmp.eq.s32.totalorder %s26, 0
        // Predicated region
        $region45: #{tpu_custom_call.1} parent=31 // pred_check
          %p244 = pneg %p243
        $region46: #{tpu_custom_call.1} parent=31 // pred_check_branch
          %246 = sbr.rel (%p244) target = $region48
        $region47: #{tpu_custom_call.1} parent=31 // pred_region
          %247 = vst [vmem:[#allocation2] sm:$0xff] 0.0
        $region48: #{tpu_custom_call.1} parent=31 // pred_fallthru
          _
        %v248 = vld [vmem:[#allocation2] sm:$0xff]
        %v249 = vld [vmem:[%s208] sm:$0xff]
        %v250 = vld [vmem:[#allocation6] sm:$0xff]
        %v251 = vld [vmem:[#allocation6 + $0x8] sm:$0xff]
        %v252 = vld [vmem:[#allocation6 + $0x10] sm:$0xff]
        %v253 = vld [vmem:[#allocation6 + $0x18] sm:$0xff]
        %vm254 = vcmask 261120
        %v256 = vsel %vm254, %v249, 0
        %258 = vmatpush.msra.mxu0 0.0
        %259 = vmatpush.msra.mxu0 0.0
        %260 = vmatpush.msra.mxu0 0.0
        %261 = vmatpush.msra.mxu0 0.0
        %262 = vmatpush.msra.mxu0 0.0
        %263 = vmatpush.msra.mxu0 0.0
        %264 = vmatpush.msra.mxu0 0.0
        %265 = vmatpush.msra.mxu0 0.0
        %266 = vmatpush.msra.mxu0 0.0
        %267 = vmatpush.msra.mxu0 0.0
        %268 = vmatpush.msra.mxu0 0.0
        %269 = vmatpush.msra.mxu0 0.0
        %270 = vmatpush.msra.mxu0 %v253
        %271 = vmatpush.msra.mxu0 %v252
        %272 = vmatpush.msra.mxu0 %v251
        %273 = vmatpush.msra.mxu0 %v250
        %274 = vmatmul.f32.gmra.mxu0 %v256
        %v275 = vpop.f32.mrf.mxu0
        %v276 = vadd.f32 0.0, %v275
        %277 = vdwg.mxu0
        %v278 = vadd.f32 %v248, %v276
        %279 = vst [vmem:[#allocation2] sm:$0xff] %v278
        // Predicated region
        $region49: #{tpu_custom_call.1} parent=31 // pred_check
          %p280 = pneg %p243
        $region50: #{tpu_custom_call.1} parent=31 // pred_check_branch
          %282 = sbr.rel (%p280) target = $region52
        $region51: #{tpu_custom_call.1} parent=31 // pred_region
          %v283 = vld [vmem:[#allocation8] sm:$0x1]
          %v284 = vld [vmem:[#allocation8 + $0x1] sm:$0x1]
          %v285 = vld [vmem:[#allocation8 + $0x2] sm:$0x1]
          %v286 = vld [vmem:[#allocation2] sm:$0xff]
          %v287 = vperm.slane %v283, 0
          %v288 = vadd.f32 %v286, %v287
          %v289 = vmax.f32 %v288, 0.0
          %290 = vadd.xlane.f32.xlu0 %v289
          %v291 = vpop.xlane.xlu0 %290
          %v292 = vrcp.pop 128.0
          %v293 = vmul.f32 128.0, %v292
          %v294 = vsub.f32 1.0, %v293
          %v295 = vmul.f32 %v292, %v294
          %v296 = vadd.f32 %v292, %v295
          %vm297 = vweird.f32 %v292
          %v298 = vsel %vm297, %v292, %v296
          %v299 = vmul.f32 %v291, %v298
          %v300 = vsub.f32 %v289, %v299
          %v301 = vmul.f32 %v300, %v300
          %302 = vadd.xlane.f32.xlu0 %v301
          %v303 = vpop.xlane.xlu0 %302
          %v304 = vmul.f32 %v303, %v298
          %v305 = vadd.f32 %v304, 1e-05
          %v306 = vrsqrt.pop %v305
          %v307 = vmul.f32 %v306, %v305
          %v308 = vmul.f32 %v307, %v306
          %v309 = vmul.f32 0.5, %v308
          %v310 = vsub.f32 1.5, %v309
          %v311 = vmul.f32 %v306, %v310
          %vm312 = vweird.f32 %v305
          %vm313 = vweird.f32 %v306
          %vm314 = vmor %vm312, %vm313
          %v315 = vsel %vm314, %v306, %v311
          %v316 = vmul.f32 %v300, %v315
          %v317 = vperm.slane %v284, 0
          %v318 = vmul.f32 %v316, %v317
          %v319 = vperm.slane %v285, 0
          %v320 = vadd.f32 %v318, %v319
          %321 = vst [vmem:[%s241] sm:$0xff] %v320
        $region52: #{tpu_custom_call.1} parent=31 // pred_fallthru
          _
        %s322 = sand.u32 %s116, 1
        %s323 = scalar_lea.sflag [#allocation5], %s322
        %s324 = sand.u32 %s116, 1
        %s325 = smul.addr %s324, 8
        %s326 = scalar_lea.vmem [#allocation9], %s325
        // Predicated region
        $region53: #{tpu_custom_call.1} parent=31 // pred_check
          %p327 = pneg %p126
        $region54: #{tpu_custom_call.1} parent=31 // pred_check_branch
          %329 = sbr.rel (%p327) target = $region56
        $region55: #{tpu_custom_call.1} parent=31 // pred_region
          %331 = vsyncadd %s323, 0
          %s332 = smul.addr %s25, 8
          %s333 = scalar_lea.hbm %s3, %s332
          %s335 = sshll.u32 %s326, 4
          %s336 = int_to_ptr.vmem [resolvable:$true] %s335
          %s337 = sshll.u32 %s333, 4
          %s338 = int_to_ptr.hbm [resolvable:$true] %s337
          %340 = dma.vmem_to_hbm [thread:$0]  %s336, 128, %s338, %s323
        $region56: #{tpu_custom_call.1} parent=31 // pred_fallthru
          _
      $region32: #{tpu_custom_call.1} parent=5 // pred_fallthru
        _
      %p341 = scmp.le.s32.totalorder 2, %s16
      // Predicated region
      $region57: #{tpu_custom_call.1} parent=5 // pred_check
        %p342 = pneg %p341
      $region58: #{tpu_custom_call.1} parent=5 // pred_check_branch
        %344 = sbr.rel (%p342) target = $region60
      $region59: #{tpu_custom_call.1} parent=5 // pred_region
        %s345 = ssub.s32 %s16, 2
        // Predicated region
        $region61: #{tpu_custom_call.1} parent=59 // pred_check
          %p346 = pneg %p132
        $region62: #{tpu_custom_call.1} parent=59 // pred_check_branch
          %348 = sbr.rel (%p346) target = $region64
        $region63: #{tpu_custom_call.1} parent=59 // pred_region
          %s349 = sand.u32 %s117, 1
          %s350 = scalar_lea.sflag [#allocation5], %s349
          %s351 = sand.u32 %s117, 1
          %s352 = smul.addr %s351, 8
          %s353 = scalar_lea.vmem [#allocation9], %s352
          %355 = dma.done %s350, 128
        $region64: #{tpu_custom_call.1} parent=59 // pred_fallthru
          _
      $region60: #{tpu_custom_call.1} parent=5 // pred_fallthru
        _
    $region6: #{tpu_custom_call.1} parent=1 // loop_footer
      %s20 = sadd.s32 1, %s16
    $region7: #{tpu_custom_call.1} parent=1 // loop_footer_branch
      %15 = sbr.rel target = $region3
    $region8: #{tpu_custom_call.1} parent=1 // loop_exit
      _
    %356 = vsyncpa [#allocation4], 1
    %s357 = scalar_lea.sflag [#allocation4], 1
    %358 = vsyncpa %s357, 1
    %359 = vsyncpa [#allocation7], 1
    %360 = vsyncpa [#allocation5], 1
    %s361 = scalar_lea.sflag [#allocation5], 1
    %362 = vsyncpa %s361, 1

</llo_original>
